<compile_context>
chip_gen: v5e
topology: v5e:2x2
jax: 0.10.0
libtpu: 0.0.40
codegen_flags: <defaults>
</compile_context>

<pallas_src>
import jax
import jax.numpy as jnp
from jax.experimental import pallas as pl
from jax.experimental.pallas import tpu as pltpu


def _round_up(x, m):
    return ((x + m - 1) // m) * m


def _linear_kernel(x_ref, w_ref, b_ref, o_ref):
    # x_ref: (tm, K_pad) bf16   w_ref: (K_pad, tn) bf16
    # b_ref: (1, tn) f32        o_ref: (tm, tn) f32
    acc = jnp.dot(x_ref[...], w_ref[...], preferred_element_type=jnp.float32)
    o_ref[...] = (acc + b_ref[...]).astype(o_ref.dtype)


def pallas_linear(x_bf16, w_t_bf16, bias2d_f32, *, tm, tn):
    """y = x @ w_t + bias, tiled over (M, N). All dims pre-padded/lane-dense."""
    M_pad, K_pad = x_bf16.shape
    _, N_pad = w_t_bf16.shape
    assert M_pad % tm == 0 and N_pad % tn == 0 and K_pad % 128 == 0

    grid_m = M_pad // tm
    grid_n = N_pad // tn

    cost = pl.CostEstimate(
        flops=2 * M_pad * K_pad * N_pad,
        transcendentals=0,
        bytes_accessed=(M_pad * K_pad * 2 + K_pad * N_pad * 2
                        + M_pad * N_pad * 4 + N_pad * 4),
    )

    return pl.pallas_call(
        _linear_kernel,
        out_shape=jax.ShapeDtypeStruct((M_pad, N_pad), jnp.float32),
        grid_spec=pltpu.PrefetchScalarGridSpec(
            num_scalar_prefetch=0,
            grid=(grid_m, grid_n),
            in_specs=[
                pl.BlockSpec((tm, K_pad), lambda i, j: (i, 0)),
                pl.BlockSpec((K_pad, tn), lambda i, j: (0, j)),
                pl.BlockSpec((1, tn), lambda i, j: (0, j)),
            ],
            out_specs=pl.BlockSpec((tm, tn), lambda i, j: (i, j)),
        ),
        compiler_params=pltpu.CompilerParams(
            dimension_semantics=("parallel", "parallel"),
            # Let XLA fuse the Unfold rearrangement / pad / bf16 cast directly
            # into the kernel's input DMA (input 0 = activations).
            allow_input_fusion=[True, False, False],
        ),
        cost_estimate=cost,
    )(x_bf16, w_t_bf16, bias2d_f32)


def _choose_row_tile(M):
    # Big tiles amortize the ~0.35 us/grid-step overhead and feed full MXU
    # rows; cap at 512 so double-buffered tiles fit v7x's smaller VMEM even
    # for deep-stage Swin shapes (K~1536, N~768).
    if M >= 512:
        return 512
    return max(8, _round_up(M, 8))


def _choose_lane_tile(N_pad):
    if N_pad <= 512:
        return N_pad
    for cand in (512, 256, 128):
        if N_pad % cand == 0:
            return cand
    return 128  # unreachable: N_pad is always a multiple of 128


class PatchMergingPallas:
    """JAX/Pallas equivalent of the PyTorch PatchMerging module."""

    def __init__(self, in_channels, out_channels, downscaling_factor, key):
        self.in_channels = in_channels
        self.out_channels = out_channels
        self.df = downscaling_factor
        in_feat = in_channels * downscaling_factor ** 2
        self.in_feat = in_feat

        # Deterministic parameter init (mimics nn.Linear's uniform init range).
        k_w, k_b = jax.random.split(key)
        bound = 1.0 / (in_feat ** 0.5)
        # weight: (out_channels, in_feat), bias: (out_channels,) -- like nn.Linear
        self.weight = jax.random.uniform(
            k_w, (out_channels, in_feat), jnp.float32, -bound, bound)
        self.bias = jax.random.uniform(
            k_b, (out_channels,), jnp.float32, -bound, bound)

        # Precompute ONCE: transposed, lane-padded bf16 weight and padded f32
        # bias.  Zero-padding along K contributes nothing to the dot product;
        # padding along N is sliced off in the wrapper.
        self.k_pad = _round_up(in_feat, 128)
        self.n_pad = _round_up(out_channels, 128)
        w_t = jnp.zeros((self.k_pad, self.n_pad), jnp.float32)
        w_t = w_t.at[:in_feat, :out_channels].set(self.weight.T)
        self.weight_t_bf16 = w_t.astype(jnp.bfloat16)
        self.bias2d = (jnp.zeros((1, self.n_pad), jnp.float32)
                       .at[0, :out_channels].set(self.bias))

    def __call__(self, x):
        # x: (b, c, h, w) NCHW, matching the PyTorch module.
        assert x.shape[-1] == x.shape[-2]
        b, c, h, w = x.shape
        df = self.df
        new_h, new_w = h // df, w // df
        in_feat = c * df * df

        # nn.Unfold(kernel=df, stride=df, padding=0) + view + permute:
        # (b, new_h, new_w, c*df*df), feature order = (c slowest, ky, kx),
        # identical to Unfold's channel layout.
        xr = x.reshape(b, c, new_h, df, new_w, df)
        xr = xr.transpose(0, 2, 4, 1, 3, 5)            # (b, nh, nw, c, df, df)
        flat = xr.reshape(b * new_h * new_w, in_feat)

        # Pad rows (M) to the row tile and features (K) to 128 lanes, cast to
        # bf16 for the MXU.  These ops are allowed to fuse into the kernel's
        # input DMA (allow_input_fusion), avoiding a standalone HBM pass.
        M = b * new_h * new_w
        tm = _choose_row_tile(M)
        M_pad = _round_up(M, tm)
        flat = jnp.pad(flat, ((0, M_pad - M), (0, self.k_pad - in_feat)))
        flat = flat.astype(jnp.bfloat16)

        tn = _choose_lane_tile(self.n_pad)
        y = pallas_linear(flat, self.weight_t_bf16, self.bias2d, tm=tm, tn=tn)
        y = y[:M, :self.out_channels]
        return y.reshape(b, new_h, new_w, self.out_channels)


def _reference(x, weight, bias, df):
    """Pure-JAX f32 reference of the PyTorch forward (for sanity check)."""
    b, c, h, w = x.shape
    new_h, new_w = h // df, w // df
    xr = x.reshape(b, c, new_h, df, new_w, df).transpose(0, 2, 4, 1, 3, 5)
    feats = xr.reshape(b, new_h, new_w, c * df * df)
    return feats @ weight.T + bias


if __name__ == "__main__":
    key = jax.random.PRNGKey(0)
    k_x, k_p = jax.random.split(key)

    # Small shapes consistent with the module: b=2, c=4, h=w=16, df=4 -> 4x4 patches.
    in_channels, out_channels, df = 4, 32, 4
    x = jax.random.normal(k_x, (2, in_channels, 16, 16), jnp.float32)

    module = PatchMergingPallas(in_channels, out_channels, df, k_p)

    fwd = jax.jit(module.__call__)
    out = fwd(x)
    out = jax.block_until_ready(out)

    ref = _reference(x, module.weight, module.bias, df)
    assert out.shape == (2, 4, 4, out_channels), out.shape
    # bf16 MXU inputs with f32 accumulation -> relaxed tolerance vs f32 ref.
    assert jnp.allclose(out, ref, atol=3e-2, rtol=3e-2), "mismatch vs reference"

    print("KERNEL_OK")
</pallas_src>

<mosaic_0001>
module attributes {stable_mosaic.version = 11 : i64} {
  func.func @_linear_kernel(%arg0: i32, %arg1: i32, %arg2: memref<32x128xbf16, #tpu.memory_space<vmem>>, %arg3: memref<128x128xbf16, #tpu.memory_space<vmem>>, %arg4: memref<1x128xf32, #tpu.memory_space<vmem>>, %arg5: memref<32x128xf32, #tpu.memory_space<vmem>>) attributes {dimension_semantics = [#tpu.dimension_semantics<parallel>, #tpu.dimension_semantics<parallel>], iteration_bounds = array<i64: 1, 1>, scalar_prefetch = 0 : i64, scratch_operands = 0 : i64, tpu.core_type = #tpu.core_type<tc>, window_params = [{transform_indices = @transform_0, window_bounds = array<i64: 32, 128>}, {transform_indices = @transform_1, window_bounds = array<i64: 128, 128>}, {transform_indices = @transform_2, window_bounds = array<i64: 1, 128>}, {transform_indices = @transform_3, window_bounds = array<i64: 32, 128>}]} {
    %c0 = arith.constant 0 : index
    %c0_0 = arith.constant 0 : index
    %0 = vector.load %arg2[%c0, %c0_0] : memref<32x128xbf16, #tpu.memory_space<vmem>>, vector<32x128xbf16>
    %c0_1 = arith.constant 0 : index
    %c0_2 = arith.constant 0 : index
    %1 = vector.load %arg3[%c0_1, %c0_2] : memref<128x128xbf16, #tpu.memory_space<vmem>>, vector<128x128xbf16>
    %cst = arith.constant dense<0.000000e+00> : vector<32x128xf32>
    %2 = tpu.matmul %0, %1, %cst {dimension_numbers = #tpu.dot_dimension_numbers<[1], [0], [0], [1], [0, 0, 1, 1], [], []>} : vector<32x128xbf16>, vector<128x128xbf16>, vector<32x128xf32> -> vector<32x128xf32>
    %c0_3 = arith.constant 0 : index
    %c0_4 = arith.constant 0 : index
    %3 = vector.load %arg4[%c0_3, %c0_4] : memref<1x128xf32, #tpu.memory_space<vmem>>, vector<1x128xf32>
    %4 = vector.broadcast %3 : vector<1x128xf32> to vector<32x128xf32>
    %5 = arith.addf %2, %4 : vector<32x128xf32>
    %c0_5 = arith.constant 0 : index
    %c0_6 = arith.constant 0 : index
    %6 = vector.load %arg5[%c0_5, %c0_6] : memref<32x128xf32, #tpu.memory_space<vmem>>, vector<32x128xf32>
    tpu.vector_store %arg5[%c0_5, %c0_6], %5 {strides = array<i32>} : memref<32x128xf32, #tpu.memory_space<vmem>>, vector<32x128xf32>,
    return
  }
  func.func @transform_0(%arg0: i32, %arg1: i32) -> (i32, i32) {
    %c0_i32 = arith.constant 0 : i32
    %c0_i32_0 = arith.constant 0 : i32
    return %arg0, %c0_i32 : i32, i32
  }
  func.func @transform_1(%arg0: i32, %arg1: i32) -> (i32, i32) {
    %c0_i32 = arith.constant 0 : i32
    %c0_i32_0 = arith.constant 0 : i32
    return %c0_i32, %arg1 : i32, i32
  }
  func.func @transform_2(%arg0: i32, %arg1: i32) -> (i32, i32) {
    %c0_i32 = arith.constant 0 : i32
    %c0_i32_0 = arith.constant 0 : i32
    return %c0_i32, %arg1 : i32, i32
  }
  func.func @transform_3(%arg0: i32, %arg1: i32) -> (i32, i32) {
    %c0_i32 = arith.constant 0 : i32
    return %arg0, %arg1 : i32, i32
  }
}

</mosaic_0001>

<llo_original>
// kernel: a_call__.2
$region0: #{a_call__.2}
  #allocation0 [shape = 'u32[]', space=smem, size = 0x4, offset = 0x4, fixed_abs, tag = 'smem constant byte address 0x4 - core index']
  #allocation1 [shape = 'u32[72,128]{1,0:T(1,128)}', space=vmem, size = 0x9000, scoped, tag = 'internal scratch']
  #allocation2 [shape = 'u32[2048]{0}', space=vmem, size = 0x2000, scoped, tag = 'scoped memory for a_call__.2']
  #allocation3 [shape = 'u32[2048]{0}', space=vmem, size = 0x2000, scoped, tag = 'scoped memory for a_call__.2']
  #allocation4 [shape = 'u32[2048]{0}', space=vmem, size = 0x2000, scoped, tag = 'scoped memory for a_call__.2']
  #allocation5 [shape = 'u32[2048]{0}', space=vmem, size = 0x2000, scoped, tag = 'scoped memory for a_call__.2']
  #allocation6 [shape = 'u32[2048]{0}', space=vmem, size = 0x2000, scoped, tag = 'scoped memory for a_call__.2']
  %s0 = inlined_call_operand.vmem [shape: bf16[128,128], index: 0, kind: input, shape index: {}]
  %s1 = inlined_call_operand.vmem [shape: f32[1,128], index: 1, kind: input, shape index: {}]
  %s2 = inlined_call_operand.vmem [shape: bf16[32,64], index: 2, kind: input, shape index: {}]
  %s3 = inlined_call_operand.<no memory space> [shape: bf16[], index: 3, kind: input, shape index: {}]
  %s4 = inlined_call_operand.hbm [shape: f32[32,128], index: 4, kind: output, shape index: {}]
  %s5 = sld [smem:[#allocation0]]
  $region22: #{a_call__.2} parent=0
    _
  %s7 = ssub.s32 1, %s5
  %s8 = scalar_select 0, %s7, %s5
  %v9 = vstv %s3
  %v10 = vunpack.i.l.bf16 %v9
  %v12 = vunpack.i.h.bf16 %v9
  $region1: #{a_call__.2} parent=0
    #allocation7 [shape = 'u8[16384]{0}', space=vmem, size = 0x4000, scoped, tag = 'output window, operand 0, single buffered']
    #allocation8 [shape = 's32[1]{0}', space=sflag, size = 0x4, scoped, tag = 'scoped memory for a_call__.2']
    #allocation9 [shape = 'u8[8192]{0}', space=vmem, size = 0x2000, dematerialized = true, scoped, tag = 'FusionAdapter Buffer %fusion.1 = bf16[32,128]{1,0:T(8,128)(2,1)} fusion(%param_2.1, %param_3), kind=kLoop, calls=%fused_computation.2.clone, metadata={op_name="jit(__call__)/jit(_pad)/pad" stack_frame_id=10}']
    %14 = vsyncpa [#allocation8], 0
    // Predicated region
    $region2: #{a_call__.2} parent=1 // pred_check
      _
    $region3: #{a_call__.2} parent=1 // pred_check_branch
      %16 = sbr.rel (0) target = $region5
    $region4: #{a_call__.2} parent=1 // pred_region
      _
    $region5: #{a_call__.2} parent=1 // pred_fallthru
      _
    // Predicated region
    $region6: #{a_call__.2} parent=1 // pred_check
      _
    $region7: #{a_call__.2} parent=1 // pred_check_branch
      %18 = sbr.rel (0) target = $region9
    $region8: #{a_call__.2} parent=1 // pred_region
      _
    $region9: #{a_call__.2} parent=1 // pred_fallthru
      _
    // Predicated region
    $region10: #{a_call__.2} parent=1 // pred_check
      _
    $region11: #{a_call__.2} parent=1 // pred_check_branch
      %20 = sbr.rel (0) target = $region13
    $region12: #{a_call__.2} parent=1 // pred_region
      _
    $region13: #{a_call__.2} parent=1 // pred_fallthru
      _
    %s22 = sor.u32 255, 127
    %s23 = sand.u32 %s22, 85
    %s24 = sshrl.u32 %s23, 1
    %s25 = sor.u32 %s23, %s24
    %s26 = sand.u32 51, %s25
    %s27 = sshrl.u32 %s26, 2
    %s28 = sor.u32 %s26, %s27
    %s29 = sand.u32 15, %s28
    %v30 = vld [vmem:[%s2] sm:%s29]
    %v31 = vunpack.c.l.bf16 %v30
    %v32 = vunpack.c.h.bf16 %v30
    %v33 = vlaneseq
    %v34 = vand.u32 %v33, 127
    %vm36 = vcmp.lt.s32.totalorder %v34, 64
    %v37 = vsel %vm36, %v31, %v10
    %v38 = vpack.c.bf16 0.0, %v37
    %s40 = ssub.s32 16, 1
    %41 = vst [vmem:[#allocation9] sm:%s40] %v38
    %s42 = scalar_lea.vmem %s2, 4
    %s44 = sor.u32 255, 127
    %s45 = sand.u32 %s44, 85
    %s46 = sshrl.u32 %s45, 1
    %s47 = sor.u32 %s45, %s46
    %s48 = sand.u32 51, %s47
    %s49 = sshrl.u32 %s48, 2
    %s50 = sor.u32 %s48, %s49
    %s51 = sand.u32 15, %s50
    %v52 = vld [vmem:[%s42] sm:%s51]
    %v53 = vunpack.c.l.bf16 %v52
    %v54 = vunpack.c.h.bf16 %v52
    %v55 = vlaneseq
    %v56 = vand.u32 %v55, 127
    %vm58 = vcmp.lt.s32.totalorder %v56, 64
    %v59 = vsel %vm58, %v53, %v10
    %s60 = scalar_lea.vmem [#allocation9], 4
    %v61 = vpack.c.bf16 0.0, %v59
    %s63 = ssub.s32 16, 1
    %64 = vst [vmem:[%s60] sm:%s63] %v61
    %s65 = scalar_lea.vmem %s2, 8
    %s67 = sor.u32 255, 127
    %s68 = sand.u32 %s67, 85
    %s69 = sshrl.u32 %s68, 1
    %s70 = sor.u32 %s68, %s69
    %s71 = sand.u32 51, %s70
    %s72 = sshrl.u32 %s71, 2
    %s73 = sor.u32 %s71, %s72
    %s74 = sand.u32 15, %s73
    %v75 = vld [vmem:[%s65] sm:%s74]
    %v76 = vunpack.c.l.bf16 %v75
    %v77 = vunpack.c.h.bf16 %v75
    %v78 = vlaneseq
    %v79 = vand.u32 %v78, 127
    %vm81 = vcmp.lt.s32.totalorder %v79, 64
    %v82 = vsel %vm81, %v76, %v10
    %s83 = scalar_lea.vmem [#allocation9], 8
    %v84 = vpack.c.bf16 0.0, %v82
    %s86 = ssub.s32 16, 1
    %87 = vst [vmem:[%s83] sm:%s86] %v84
    %s88 = scalar_lea.vmem %s2, 12
    %s90 = sor.u32 255, 127
    %s91 = sand.u32 %s90, 85
    %s92 = sshrl.u32 %s91, 1
    %s93 = sor.u32 %s91, %s92
    %s94 = sand.u32 51, %s93
    %s95 = sshrl.u32 %s94, 2
    %s96 = sor.u32 %s94, %s95
    %s97 = sand.u32 15, %s96
    %v98 = vld [vmem:[%s88] sm:%s97]
    %v99 = vunpack.c.l.bf16 %v98
    %v100 = vunpack.c.h.bf16 %v98
    %v101 = vlaneseq
    %v102 = vand.u32 %v101, 127
    %vm104 = vcmp.lt.s32.totalorder %v102, 64
    %v105 = vsel %vm104, %v99, %v10
    %s106 = scalar_lea.vmem [#allocation9], 12
    %v107 = vpack.c.bf16 0.0, %v105
    %s109 = ssub.s32 16, 1
    %110 = vst [vmem:[%s106] sm:%s109] %v107
    %v111 = vld [vmem:[#allocation9] sm:$0xf]
    %v112 = vld [vmem:[#allocation9 + $0x4] sm:$0xf]
    %v113 = vld [vmem:[#allocation9 + $0x8] sm:$0xf]
    %v114 = vld [vmem:[#allocation9 + $0xc] sm:$0xf]
    %v115 = vld [vmem:[%s0] sm:$0xf]
    %v116 = vld [vmem:[%s0 + $0x4] sm:$0xf]
    %v117 = vld [vmem:[%s0 + $0x8] sm:$0xf]
    %v118 = vld [vmem:[%s0 + $0xc] sm:$0xf]
    %v119 = vld [vmem:[%s0 + $0x10] sm:$0xf]
    %v120 = vld [vmem:[%s0 + $0x14] sm:$0xf]
    %v121 = vld [vmem:[%s0 + $0x18] sm:$0xf]
    %v122 = vld [vmem:[%s0 + $0x1c] sm:$0xf]
    %v123 = vld [vmem:[%s0 + $0x20] sm:$0xf]
    %v124 = vld [vmem:[%s0 + $0x24] sm:$0xf]
    %v125 = vld [vmem:[%s0 + $0x28] sm:$0xf]
    %v126 = vld [vmem:[%s0 + $0x2c] sm:$0xf]
    %v127 = vld [vmem:[%s0 + $0x30] sm:$0xf]
    %v128 = vld [vmem:[%s0 + $0x34] sm:$0xf]
    %v129 = vld [vmem:[%s0 + $0x38] sm:$0xf]
    %v130 = vld [vmem:[%s0 + $0x3c] sm:$0xf]
    %v131 = vld [vmem:[%s1] sm:$0x1]
    %v133 = vperm.slane %v131, 0
    %v139 = vunpack.c.l.b16 %v111
    %v140 = vunpack.c.l.b16 %v112
    %v141 = vunpack.c.l.b16 %v113
    %v142 = vunpack.c.l.b16 %v114
    %v143 = vpack.c.b16 %v140, %v139
    %v144 = vpack.c.b16 %v142, %v141
    %v163 = vunpack.c.l.b16 %v115
    %v164 = vunpack.c.l.b16 %v116
    %v165 = vunpack.c.l.b16 %v117
    %v166 = vunpack.c.l.b16 %v118
    %v167 = vunpack.c.l.b16 %v119
    %v168 = vunpack.c.l.b16 %v120
    %v169 = vunpack.c.l.b16 %v121
    %v170 = vunpack.c.l.b16 %v122
    %v171 = vunpack.c.l.b16 %v123
    %v172 = vunpack.c.l.b16 %v124
    %v173 = vunpack.c.l.b16 %v125
    %v174 = vunpack.c.l.b16 %v126
    %v175 = vunpack.c.l.b16 %v127
    %v176 = vunpack.c.l.b16 %v128
    %v177 = vunpack.c.l.b16 %v129
    %v178 = vunpack.c.l.b16 %v130
    %v179 = vpack.c.b16 %v164, %v163
    %v180 = vpack.c.b16 %v166, %v165
    %v181 = vpack.c.b16 %v168, %v167
    %v182 = vpack.c.b16 %v170, %v169
    %v183 = vpack.c.b16 %v172, %v171
    %v184 = vpack.c.b16 %v174, %v173
    %v185 = vpack.c.b16 %v176, %v175
    %v186 = vpack.c.b16 %v178, %v177
    %195 = vmatpush.bf16.msra.mxu0 %v186
    %196 = vmatpush.bf16.msra.mxu0 %v185
    %197 = vmatpush.bf16.msra.mxu0 %v184
    %198 = vmatpush.bf16.msra.mxu0 %v183
    %199 = vmatpush.bf16.msra.mxu0 %v182
    %200 = vmatpush.bf16.msra.mxu0 %v181
    %201 = vmatpush.bf16.msra.mxu0 %v180
    %202 = vmatpush.bf16.msra.mxu0 %v179
    %203 = vmatmul.bf16.gmra.mxu0 %v143
    %v204 = vpop.f32.mrf.mxu0
    %v205 = vadd.f32 %v133, %v204
    %v206 = vpop.f32.mrf.mxu0
    %v207 = vadd.f32 %v133, %v206
    %208 = vmatmul.bf16.gmra.mxu0 %v144
    %v209 = vpop.f32.mrf.mxu0
    %v210 = vadd.f32 %v133, %v209
    %v211 = vpop.f32.mrf.mxu0
    %v212 = vadd.f32 %v133, %v211
    %213 = vdwg.mxu0
    %214 = vst [vmem:[#allocation7] sm:$0xff] %v205
    %215 = vst [vmem:[#allocation7 + $0x8] sm:$0xff] %v207
    %216 = vst [vmem:[#allocation7 + $0x10] sm:$0xff] %v210
    %217 = vst [vmem:[#allocation7 + $0x18] sm:$0xff] %v212
    // Predicated region
    $region14: #{a_call__.2} parent=1 // pred_check
      _
    $region15: #{a_call__.2} parent=1 // pred_check_branch
      %219 = sbr.rel (0) target = $region17
    $region16: #{a_call__.2} parent=1 // pred_region
      %221 = vsyncadd [#allocation8], 0
      %s222 = sshll.u32 [#allocation7], 4
      %s223 = int_to_ptr.vmem [resolvable:$true] %s222
      %s224 = sshll.u32 %s4, 4
      %s225 = int_to_ptr.hbm [resolvable:$true] %s224
      %230 = dma.vmem_to_hbm [thread:$0]  %s223, 512, %s225, [#allocation8], 128, 128, 8
    $region17: #{a_call__.2} parent=1 // pred_fallthru
      _
    // Predicated region
    $region18: #{a_call__.2} parent=1 // pred_check
      _
    $region19: #{a_call__.2} parent=1 // pred_check_branch
      %232 = sbr.rel (0) target = $region21
    $region20: #{a_call__.2} parent=1 // pred_region
      %234 = dma.done [#allocation8], 512
    $region21: #{a_call__.2} parent=1 // pred_fallthru
      _
    %235 = vsyncpa [#allocation8], 1

</llo_original>
